<compile_context>
chip_gen: v6e
topology: v6e:2x2x1
jax: 0.10.0
libtpu: 0.0.40
codegen_flags: <defaults>
</compile_context>

<pallas_src>
import jax
import jax.numpy as jnp
from jax.experimental import pallas as pl
from jax.experimental.pallas import tpu as pltpu


def _round_up(x, m):
    return (x + m - 1) // m * m


def _cdiv(a, b):
    return (a + b - 1) // b


def _tpu_params():
    """Best-effort (generation, per-core VMEM bytes, tensorcores per chip)."""
    gen = None
    try:
        kind = jax.devices()[0].device_kind.lower()
        if "v7" in kind:
            gen = "v7x"
        elif "v6" in kind:
            gen = "v6e"
        elif "v5" in kind:
            gen = "v5e"
    except Exception:
        pass
    vmem = None
    try:
        vmem = int(pltpu.get_tpu_info().vmem_capacity_bytes)
    except Exception:
        pass
    if vmem is None or vmem <= 0:
        vmem = 64 * 1024 * 1024 if gen == "v7x" else 128 * 1024 * 1024
    num_cores = 2 if gen == "v7x" else 1
    return gen, vmem, num_cores


# --------------------------------------------------------------------------
# Kernels
# --------------------------------------------------------------------------
def taos_mlp_kernel_resident(x_ref, wg_ref, wu_ref, wd_ref, o_ref):
    """Whole intermediate dim resident: one grid axis over token tiles."""
    x = x_ref[...]
    g = jnp.dot(x, wg_ref[...], preferred_element_type=jnp.float32)
    u = jnp.dot(x, wu_ref[...], preferred_element_type=jnp.float32)
    h = (g * jax.nn.sigmoid(g)) * u                      # f32 on VPU/EUP
    o_ref[...] = jnp.dot(h.astype(wd_ref.dtype), wd_ref[...],
                         preferred_element_type=jnp.float32).astype(o_ref.dtype)


def taos_mlp_kernel_streamed(x_ref, wg_ref, wu_ref, wd_ref, o_ref, acc_ref):
    """Intermediate dim streamed over the last ('arbitrary') grid axis."""
    k = pl.program_id(1)

    @pl.when(k == 0)
    def _():
        acc_ref[...] = jnp.zeros_like(acc_ref)

    x = x_ref[...]
    g = jnp.dot(x, wg_ref[...], preferred_element_type=jnp.float32)
    u = jnp.dot(x, wu_ref[...], preferred_element_type=jnp.float32)
    h = (g * jax.nn.sigmoid(g)) * u
    acc_ref[...] += jnp.dot(h.astype(wd_ref.dtype), wd_ref[...],
                            preferred_element_type=jnp.float32)

    @pl.when(k == pl.num_programs(1) - 1)
    def _():
        o_ref[...] = acc_ref[...].astype(o_ref.dtype)


# --------------------------------------------------------------------------
# Wrapper
# --------------------------------------------------------------------------
def taos_mlp(x, w_gate, w_up, w_down, *, tm=None, ti=None,
             compute_dtype=jnp.bfloat16):
    """x: [M, H].  w_gate/w_up: [H, I], w_down: [I, H] (already transposed
    from PyTorch's [out, in] layout).  Matmuls run in `compute_dtype`; pass
    weights already stored in `compute_dtype` to avoid a per-call cast."""
    M, H = x.shape
    I = w_gate.shape[1]
    out_dtype = x.dtype

    cb = jnp.dtype(compute_dtype).itemsize
    ob = jnp.dtype(out_dtype).itemsize

    gen, vmem_cap, num_cores = _tpu_params()
    vmem_budget = int(vmem_cap * 0.75)          # ~96 MiB v5e/v6e, ~48 MiB v7x
    vmem_cap_limit = int(vmem_cap * 0.90)       # leave room for Mosaic scratch

    # ---- token tile ---------------------------------------------------------
    auto_tm = tm is None
    if auto_tm:
        # v5e/v6e (128 MiB VMEM): big tiles so prefill clears the weight-stream
        # roofline.  v7x (64 MiB/TC): 256 is near the knee and fits.
        tm = 512 if vmem_cap >= 100 * 1024 * 1024 else 256
    tm = max(16, min(_round_up(tm, 16), _round_up(M, 16)))
    if auto_tm and num_cores >= 2 and M > 16 and _cdiv(M, tm) < num_cores:
        # v7x: make sure both TensorCores get a token tile.
        tm = max(16, _round_up(_cdiv(M, num_cores), 16))

    def _fixed_bytes(t):
        # x (double buffered) + out (double buffered) + f32 accumulator
        return 2 * t * H * cb + 2 * t * H * ob + t * H * 4

    # Fallback for very large H: shrink tm until a minimal ti=128 step fits.
    while tm > 16 and (_fixed_bytes(tm)
                       + 6 * H * 128 * cb + tm * 128 * (12 + cb)) > vmem_budget:
        tm = max(16, _round_up(tm // 2, 16))

    # ---- intermediate tile --------------------------------------------------
    if ti is None:
        fixed = _fixed_bytes(tm)
        # Per intermediate column: double-buffered gate/up/down weight slices
        # plus the in-kernel f32 temporaries (g, u, h) and the bf16 copy of h.
        per_ti = 6 * H * cb + tm * (12 + cb)
        ti_max = max(128, (vmem_budget - fixed) // per_ti)
        if ti_max >= I:
            ti = I
        else:
            n_k_t = _cdiv(I, ti_max)
            ti_even = _cdiv(I, n_k_t)
            ti = _round_up(ti_even, 256 if ti_even >= 256 else 128)
    else:
        ti = min(ti, I)
        if ti < I:
            ti = max(128, (ti // 128) * 128)
    if ti >= I:
        ti = I

    n_m = _cdiv(M, tm)
    n_k = _cdiv(I, ti)
    M_pad = n_m * tm
    I_pad = n_k * ti
    streamed = n_k > 1

    # ---- pad + cast operands ------------------------------------------------
    if M_pad > M:
        x = jnp.pad(x, ((0, M_pad - M), (0, 0)))
    x = x.astype(compute_dtype)
    if I_pad > I:
        # Zero padding of the intermediate dim contributes exactly zero
        # through silu/gating and the down projection.
        w_gate = jnp.pad(w_gate, ((0, 0), (0, I_pad - I)))
        w_up = jnp.pad(w_up, ((0, 0), (0, I_pad - I)))
        w_down = jnp.pad(w_down, ((0, I_pad - I), (0, 0)))
    wg = w_gate.astype(compute_dtype)
    wu = w_up.astype(compute_dtype)
    wd = w_down.astype(compute_dtype)

    # ---- VMEM + cost bookkeeping --------------------------------------------
    footprint = (2 * tm * H * cb                 # x (double buffered)
                 + 2 * tm * H * ob               # out (double buffered)
                 + (tm * H * 4 if streamed else 0)  # f32 accumulator
                 + 6 * H * ti * cb               # gate/up/down weight tiles x2
                 + tm * ti * (12 + cb))          # in-kernel f32 temporaries
    vmem_limit = int(min(vmem_cap_limit,
                         max(footprint + 8 * 1024 * 1024, 32 * 1024 * 1024)))

    weight_bytes = 3 * H * I_pad * cb
    cost = pl.CostEstimate(
        flops=6 * M_pad * H * I_pad,
        transcendentals=M_pad * I_pad,
        bytes_accessed=int(M_pad * H * (cb + ob)
                           + (n_m if streamed else 1) * weight_bytes),
    )

    if not streamed:
        # TODO(synk): pipeline_mode=pl.Buffered(1) on the constant-index weight
        # specs would drop their unused second buffer and free more VMEM.
        grid_spec = pltpu.PrefetchScalarGridSpec(
            num_scalar_prefetch=0,
            grid=(n_m,),
            in_specs=[
                pl.BlockSpec((tm, H), lambda i: (i, 0)),   # token tile
                pl.BlockSpec((H, I_pad), lambda i: (0, 0)),  # gate weight
                pl.BlockSpec((H, I_pad), lambda i: (0, 0)),  # up weight
                pl.BlockSpec((I_pad, H), lambda i: (0, 0)),  # down weight
            ],
            out_specs=pl.BlockSpec((tm, H), lambda i: (i, 0)),
            scratch_shapes=[],
        )
        kernel = taos_mlp_kernel_resident
        dim_sem = ("parallel",)
    else:
        grid_spec = pltpu.PrefetchScalarGridSpec(
            num_scalar_prefetch=0,
            grid=(n_m, n_k),                               # reduction axis last
            in_specs=[
                pl.BlockSpec((tm, H), lambda i, k: (i, 0)),   # token tile
                pl.BlockSpec((H, ti), lambda i, k: (0, k)),   # gate weight tile
                pl.BlockSpec((H, ti), lambda i, k: (0, k)),   # up weight tile
                pl.BlockSpec((ti, H), lambda i, k: (k, 0)),   # down weight tile
            ],
            out_specs=pl.BlockSpec((tm, H), lambda i, k: (i, 0)),
            scratch_shapes=[pltpu.VMEM((tm, H), jnp.float32)],
        )
        kernel = taos_mlp_kernel_streamed
        dim_sem = ("parallel", "arbitrary")

    out = pl.pallas_call(
        kernel,
        out_shape=jax.ShapeDtypeStruct((M_pad, H), out_dtype),
        grid_spec=grid_spec,
        compiler_params=pltpu.CompilerParams(
            dimension_semantics=dim_sem,
            vmem_limit_bytes=vmem_limit,
        ),
        cost_estimate=cost,
    )(x, wg, wu, wd)

    if M_pad > M:
        out = out[:M]
    return out


def taos_mlp_module(hidden_state, params, *, tm=None, ti=None,
                    compute_dtype=jnp.bfloat16):
    """hidden_state: [batch, seq, hidden].  params: dict of transposed weights."""
    B, S, H = hidden_state.shape
    x = hidden_state.reshape(B * S, H)
    out = taos_mlp(x, params["w_gate"], params["w_up"], params["w_down"],
                   tm=tm, ti=ti, compute_dtype=compute_dtype)
    return out.reshape(B, S, H)


def init_params(key, hidden_size, intermediate_size, dtype=jnp.float32):
    k1, k2, k3 = jax.random.split(key, 3)
    # PyTorch nn.Linear stores weight as [out, in]; we keep transposed [in, out].
    scale_h = 1.0 / jnp.sqrt(hidden_size)
    scale_i = 1.0 / jnp.sqrt(intermediate_size)
    w_gate = jax.random.uniform(k1, (hidden_size, intermediate_size),
                                dtype, -scale_h, scale_h)
    w_up = jax.random.uniform(k2, (hidden_size, intermediate_size),
                              dtype, -scale_h, scale_h)
    w_down = jax.random.uniform(k3, (intermediate_size, hidden_size),
                                dtype, -scale_i, scale_i)
    return {"w_gate": w_gate, "w_up": w_up, "w_down": w_down}


def taos_mlp_reference(hidden_state, params, compute_dtype=jnp.bfloat16):
    """Pure-JAX reference mirroring the kernel's dtype policy
    (bf16 MXU operands, f32 accumulation / elementwise math)."""
    x = hidden_state.astype(compute_dtype)
    wg = params["w_gate"].astype(compute_dtype)
    wu = params["w_up"].astype(compute_dtype)
    wd = params["w_down"].astype(compute_dtype)
    g = jnp.dot(x, wg, preferred_element_type=jnp.float32)
    u = jnp.dot(x, wu, preferred_element_type=jnp.float32)
    h = (g * jax.nn.sigmoid(g)) * u
    out = jnp.dot(h.astype(compute_dtype), wd, preferred_element_type=jnp.float32)
    return out.astype(hidden_state.dtype)


if __name__ == "__main__":
    # --- test 1: small module-shaped input (resident / n_k == 1 path) -------
    batch, seq, hidden_size, intermediate_size = 2, 8, 32, 64
    key = jax.random.PRNGKey(0)
    kx, kp = jax.random.split(key)
    hidden_state = jax.random.normal(kx, (batch, seq, hidden_size), jnp.float32)
    params = init_params(kp, hidden_size, intermediate_size)

    out = taos_mlp_module(hidden_state, params)
    out = jax.block_until_ready(out)
    ref = taos_mlp_reference(hidden_state, params)
    assert out.shape == (batch, seq, hidden_size)
    assert jnp.allclose(out, ref, atol=2e-3, rtol=2e-3), (
        float(jnp.max(jnp.abs(out - ref))))

    # --- test 2: streamed (n_k > 1) + M-padded path --------------------------
    b2, s2, h2, i2 = 3, 16, 128, 512
    kx2, kp2 = jax.random.split(jax.random.PRNGKey(0), 2)
    hs2 = jax.random.normal(kx2, (b2, s2, h2), jnp.float32)
    params2 = init_params(kp2, h2, i2)
    out2 = taos_mlp_module(hs2, params2, tm=32, ti=256)  # forces n_m=2, n_k=2
    out2 = jax.block_until_ready(out2)
    ref2 = taos_mlp_reference(hs2, params2)
    assert out2.shape == (b2, s2, h2)
    assert jnp.allclose(out2, ref2, atol=2e-3, rtol=2e-3), (
        float(jnp.max(jnp.abs(out2 - ref2))))

    print("KERNEL_OK")
</pallas_src>

<mosaic_0001>
module attributes {stable_mosaic.version = 11 : i64} {
  func.func @taos_mlp_kernel_resident(%arg0: i32, %arg1: memref<16x32xbf16, #tpu.memory_space<vmem>>, %arg2: memref<32x64xbf16, #tpu.memory_space<vmem>>, %arg3: memref<32x64xbf16, #tpu.memory_space<vmem>>, %arg4: memref<64x32xbf16, #tpu.memory_space<vmem>>, %arg5: memref<16x32xf32, #tpu.memory_space<vmem>>) attributes {dimension_semantics = [#tpu.dimension_semantics<parallel>], iteration_bounds = array<i64: 1>, scalar_prefetch = 0 : i64, scratch_operands = 0 : i64, tpu.core_type = #tpu.core_type<tc>, window_params = [{transform_indices = @transform_0, window_bounds = array<i64: 16, 32>}, {pipeline_mode = #tpu.pipeline_mode<synchronous>, transform_indices = @transform_1, window_bounds = array<i64: 32, 64>}, {pipeline_mode = #tpu.pipeline_mode<synchronous>, transform_indices = @transform_2, window_bounds = array<i64: 32, 64>}, {pipeline_mode = #tpu.pipeline_mode<synchronous>, transform_indices = @transform_3, window_bounds = array<i64: 64, 32>}, {transform_indices = @transform_4, window_bounds = array<i64: 16, 32>}]} {
    %c0 = arith.constant 0 : index
    %c0_0 = arith.constant 0 : index
    %0 = vector.load %arg1[%c0, %c0_0] : memref<16x32xbf16, #tpu.memory_space<vmem>>, vector<16x32xbf16>
    %c0_1 = arith.constant 0 : index
    %c0_2 = arith.constant 0 : index
    %1 = vector.load %arg2[%c0_1, %c0_2] : memref<32x64xbf16, #tpu.memory_space<vmem>>, vector<32x64xbf16>
    %cst = arith.constant dense<0.000000e+00> : vector<16x64xf32>
    %2 = tpu.matmul %0, %1, %cst {dimension_numbers = #tpu.dot_dimension_numbers<[1], [0], [0], [1], [0, 0, 1, 1], [], []>} : vector<16x32xbf16>, vector<32x64xbf16>, vector<16x64xf32> -> vector<16x64xf32>
    %c0_3 = arith.constant 0 : index
    %c0_4 = arith.constant 0 : index
    %3 = vector.load %arg3[%c0_3, %c0_4] : memref<32x64xbf16, #tpu.memory_space<vmem>>, vector<32x64xbf16>
    %cst_5 = arith.constant dense<0.000000e+00> : vector<16x64xf32>
    %4 = tpu.matmul %0, %3, %cst_5 {dimension_numbers = #tpu.dot_dimension_numbers<[1], [0], [0], [1], [0, 0, 1, 1], [], []>} : vector<16x32xbf16>, vector<32x64xbf16>, vector<16x64xf32> -> vector<16x64xf32>
    %5 = arith.negf %2 : vector<16x64xf32>
    %6 = math.exp %5 : vector<16x64xf32>
    %cst_6 = arith.constant 1.000000e+00 : f32
    %7 = vector.broadcast %cst_6 : f32 to vector<16x64xf32>
    %8 = arith.addf %7, %6 : vector<16x64xf32>
    %9 = arith.divf %7, %8 : vector<16x64xf32>
    %10 = arith.mulf %2, %9 : vector<16x64xf32>
    %11 = arith.mulf %10, %4 : vector<16x64xf32>
    %12 = arith.truncf %11 : vector<16x64xf32> to vector<16x64xbf16>
    %c0_7 = arith.constant 0 : index
    %c0_8 = arith.constant 0 : index
    %13 = vector.load %arg4[%c0_7, %c0_8] : memref<64x32xbf16, #tpu.memory_space<vmem>>, vector<64x32xbf16>
    %cst_9 = arith.constant dense<0.000000e+00> : vector<16x32xf32>
    %14 = tpu.matmul %12, %13, %cst_9 {dimension_numbers = #tpu.dot_dimension_numbers<[1], [0], [0], [1], [0, 0, 1, 1], [], []>} : vector<16x64xbf16>, vector<64x32xbf16>, vector<16x32xf32> -> vector<16x32xf32>
    %c0_10 = arith.constant 0 : index
    %c0_11 = arith.constant 0 : index
    %15 = vector.load %arg5[%c0_10, %c0_11] : memref<16x32xf32, #tpu.memory_space<vmem>>, vector<16x32xf32>
    tpu.vector_store %arg5[%c0_10, %c0_11], %14 {strides = array<i32>} : memref<16x32xf32, #tpu.memory_space<vmem>>, vector<16x32xf32>,
    return
  }
  func.func @transform_0(%arg0: i32) -> (i32, i32) {
    %c0_i32 = arith.constant 0 : i32
    %c0_i32_0 = arith.constant 0 : i32
    return %arg0, %c0_i32 : i32, i32
  }
  func.func @transform_1(%arg0: i32) -> (i32, i32) {
    %c0_i32 = arith.constant 0 : i32
    %c0_i32_0 = arith.constant 0 : i32
    %c0_i32_1 = arith.constant 0 : i32
    return %c0_i32, %c0_i32_0 : i32, i32
  }
  func.func @transform_2(%arg0: i32) -> (i32, i32) {
    %c0_i32 = arith.constant 0 : i32
    %c0_i32_0 = arith.constant 0 : i32
    %c0_i32_1 = arith.constant 0 : i32
    return %c0_i32, %c0_i32_0 : i32, i32
  }
  func.func @transform_3(%arg0: i32) -> (i32, i32) {
    %c0_i32 = arith.constant 0 : i32
    %c0_i32_0 = arith.constant 0 : i32
    %c0_i32_1 = arith.constant 0 : i32
    return %c0_i32, %c0_i32_0 : i32, i32
  }
  func.func @transform_4(%arg0: i32) -> (i32, i32) {
    %c0_i32 = arith.constant 0 : i32
    %c0_i32_0 = arith.constant 0 : i32
    return %arg0, %c0_i32 : i32, i32
  }
}

</mosaic_0001>

<llo_original>
// kernel: tpu_custom_call.1
$region0: #{tpu_custom_call.1}
  #allocation0 [shape = 'u32[]', space=smem, size = 0x4, offset = 0x4, fixed_abs, tag = 'smem constant byte address 0x4 - core index']
  #allocation1 [shape = 'u32[144,128]{1,0:T(1,128)}', space=vmem, size = 0x12000, scoped, tag = 'internal scratch']
  %s0 = inlined_call_operand.vmem [shape: bf16[16,32], index: 0, kind: input, shape index: {}]
  %s1 = inlined_call_operand.vmem [shape: bf16[32,64], index: 1, kind: input, shape index: {}]
  %s2 = inlined_call_operand.vmem [shape: bf16[32,64], index: 2, kind: input, shape index: {}]
  %s3 = inlined_call_operand.vmem [shape: bf16[64,32], index: 3, kind: input, shape index: {}]
  %s4 = inlined_call_operand.hbm [shape: f32[16,32], index: 4, kind: output, shape index: {}]
  %s5 = sld [smem:[#allocation0]]
  $region26: #{tpu_custom_call.1} parent=0
    _
  %s7 = ssub.s32 1, %s5
  %s8 = scalar_select 0, %s7, %s5
  $region1: #{tpu_custom_call.1} parent=0
    #allocation2 [shape = 'u8[8192]{0}', space=vmem, size = 0x2000, scoped, tag = 'output window, operand 0, single buffered']
    #allocation3 [shape = 's32[1]{0}', space=sflag, size = 0x4, scoped, tag = 'scoped memory for tpu_custom_call.1']
    %9 = vsyncpa [#allocation3], 0
    // Predicated region
    $region2: #{tpu_custom_call.1} parent=1 // pred_check
      _
    $region3: #{tpu_custom_call.1} parent=1 // pred_check_branch
      %11 = sbr.rel (0) target = $region5
    $region4: #{tpu_custom_call.1} parent=1 // pred_region
      _
    $region5: #{tpu_custom_call.1} parent=1 // pred_fallthru
      _
    // Predicated region
    $region6: #{tpu_custom_call.1} parent=1 // pred_check
      _
    $region7: #{tpu_custom_call.1} parent=1 // pred_check_branch
      %13 = sbr.rel (0) target = $region9
    $region8: #{tpu_custom_call.1} parent=1 // pred_region
      _
    $region9: #{tpu_custom_call.1} parent=1 // pred_fallthru
      _
    // Predicated region
    $region10: #{tpu_custom_call.1} parent=1 // pred_check
      _
    $region11: #{tpu_custom_call.1} parent=1 // pred_check_branch
      %15 = sbr.rel (0) target = $region13
    $region12: #{tpu_custom_call.1} parent=1 // pred_region
      _
    $region13: #{tpu_custom_call.1} parent=1 // pred_fallthru
      _
    // Predicated region
    $region14: #{tpu_custom_call.1} parent=1 // pred_check
      _
    $region15: #{tpu_custom_call.1} parent=1 // pred_check_branch
      %17 = sbr.rel (0) target = $region17
    $region16: #{tpu_custom_call.1} parent=1 // pred_region
      _
    $region17: #{tpu_custom_call.1} parent=1 // pred_fallthru
      _
    %v19 = vld [vmem:[%s0] sm:$0xf]
    %v20 = vld [vmem:[%s0 + $0x4] sm:$0xf]
    %v21 = vld [vmem:[%s1] sm:$0xf]
    %v22 = vld [vmem:[%s1 + $0x4] sm:$0xf]
    %v23 = vld [vmem:[%s1 + $0x8] sm:$0xf]
    %v24 = vld [vmem:[%s1 + $0xc] sm:$0xf]
    %v27 = vunpack.c.l.b16 %v19
    %v28 = vunpack.c.l.b16 %v20
    %v29 = vpack.c.b16 %v28, %v27
    %v34 = vunpack.c.l.b16 %v21
    %v35 = vunpack.c.l.b16 %v22
    %v36 = vunpack.c.l.b16 %v23
    %v37 = vunpack.c.l.b16 %v24
    %v38 = vpack.c.b16 %v35, %v34
    %v39 = vpack.c.b16 %v37, %v36
    %vm42 = vcmask 261120
    %v44 = vsel %vm42, %v29, 0
    %46 = vmatprep.subr.bf16.mxu0 0
    %47 = vmatpush1.bf16.msra.mxu0 0
    %48 = vmatprep.subr.bf16.mxu0 0
    %49 = vmatpush1.bf16.msra.mxu0 0
    %50 = vmatprep.subr.bf16.mxu0 0
    %51 = vmatpush1.bf16.msra.mxu0 0
    %52 = vmatprep.subr.bf16.mxu0 0
    %53 = vmatpush1.bf16.msra.mxu0 0
    %54 = vmatprep.subr.bf16.mxu0 0
    %55 = vmatpush1.bf16.msra.mxu0 0
    %56 = vmatprep.subr.bf16.mxu0 0
    %57 = vmatpush1.bf16.msra.mxu0 0
    %58 = vmatprep.subr.bf16.mxu0 0
    %59 = vmatpush1.bf16.msra.mxu0 %v39
    %60 = vmatprep.subr.bf16.mxu0 0
    %61 = vmatpush1.bf16.msra.mxu0 %v38
    %62 = vmatprep.subr.bf16.mxu0 0
    %63 = vmatpush2.bf16.msra.mxu0 0
    %64 = vmatprep.subr.bf16.mxu0 0
    %65 = vmatpush2.bf16.msra.mxu0 0
    %66 = vmatprep.subr.bf16.mxu0 0
    %67 = vmatpush2.bf16.msra.mxu0 0
    %68 = vmatprep.subr.bf16.mxu0 0
    %69 = vmatpush2.bf16.msra.mxu0 0
    %70 = vmatprep.subr.bf16.mxu0 0
    %71 = vmatpush2.bf16.msra.mxu0 0
    %72 = vmatprep.subr.bf16.mxu0 0
    %73 = vmatpush2.bf16.msra.mxu0 0
    %74 = vmatprep.subr.bf16.mxu0 0
    %75 = vmatpush2.bf16.msra.mxu0 0
    %76 = vmatprep.subr.bf16.mxu0 0
    %77 = vmatpush2.bf16.msra.mxu0 0
    %78 = vmatprep.mubr.bf16.mxu0 0
    %79 = vmatmul.mubr.bf16.gmra.mxu0 %v44
    %v80 = vpop.f32.mrf.mxu0
    %v81 = vadd.f32 0.0, %v80
    %v82 = vpop.f32.mrf.mxu0
    %v83 = vpop.f32.mrf.mxu0
    %v84 = vadd.f32 0.0, %v83
    %v85 = vpop.f32.mrf.mxu0
    %86 = vdwg.mxu0
    %v87 = vld [vmem:[%s2] sm:$0xf]
    %v88 = vld [vmem:[%s2 + $0x4] sm:$0xf]
    %v89 = vld [vmem:[%s2 + $0x8] sm:$0xf]
    %v90 = vld [vmem:[%s2 + $0xc] sm:$0xf]
    %v95 = vunpack.c.l.b16 %v87
    %v96 = vunpack.c.l.b16 %v88
    %v97 = vunpack.c.l.b16 %v89
    %v98 = vunpack.c.l.b16 %v90
    %v99 = vpack.c.b16 %v96, %v95
    %v100 = vpack.c.b16 %v98, %v97
    %103 = vmatprep.subr.bf16.mxu0 0
    %104 = vmatpush1.bf16.msra.mxu0 0
    %105 = vmatprep.subr.bf16.mxu0 0
    %106 = vmatpush1.bf16.msra.mxu0 0
    %107 = vmatprep.subr.bf16.mxu0 0
    %108 = vmatpush1.bf16.msra.mxu0 0
    %109 = vmatprep.subr.bf16.mxu0 0
    %110 = vmatpush1.bf16.msra.mxu0 0
    %111 = vmatprep.subr.bf16.mxu0 0
    %112 = vmatpush1.bf16.msra.mxu0 0
    %113 = vmatprep.subr.bf16.mxu0 0
    %114 = vmatpush1.bf16.msra.mxu0 0
    %115 = vmatprep.subr.bf16.mxu0 0
    %116 = vmatpush1.bf16.msra.mxu0 %v100
    %117 = vmatprep.subr.bf16.mxu0 0
    %118 = vmatpush1.bf16.msra.mxu0 %v99
    %119 = vmatprep.subr.bf16.mxu0 0
    %120 = vmatpush2.bf16.msra.mxu0 0
    %121 = vmatprep.subr.bf16.mxu0 0
    %122 = vmatpush2.bf16.msra.mxu0 0
    %123 = vmatprep.subr.bf16.mxu0 0
    %124 = vmatpush2.bf16.msra.mxu0 0
    %125 = vmatprep.subr.bf16.mxu0 0
    %126 = vmatpush2.bf16.msra.mxu0 0
    %127 = vmatprep.subr.bf16.mxu0 0
    %128 = vmatpush2.bf16.msra.mxu0 0
    %129 = vmatprep.subr.bf16.mxu0 0
    %130 = vmatpush2.bf16.msra.mxu0 0
    %131 = vmatprep.subr.bf16.mxu0 0
    %132 = vmatpush2.bf16.msra.mxu0 0
    %133 = vmatprep.subr.bf16.mxu0 0
    %134 = vmatpush2.bf16.msra.mxu0 0
    %135 = vmatprep.mubr.bf16.mxu0 0
    %136 = vmatmul.mubr.bf16.gmra.mxu0 %v44
    %v137 = vpop.f32.mrf.mxu0
    %v138 = vadd.f32 0.0, %v137
    %v139 = vpop.f32.mrf.mxu0
    %v140 = vpop.f32.mrf.mxu0
    %v141 = vadd.f32 0.0, %v140
    %v142 = vpop.f32.mrf.mxu0
    %143 = vdwg.mxu0
    %v144 = vxor.u32 %v81, 2147483648
    %v145 = vxor.u32 %v84, 2147483648
    %v146 = vmul.f32 %v144, 1.442695
    %v147 = vpow.pop %v146
    %v148 = vmul.f32 %v145, 1.442695
    %v149 = vpow.pop %v148
    %v150 = vadd.f32 %v147, 1.0
    %v151 = vadd.f32 %v149, 1.0
    %v152 = vrcp.pop %v150
    %v153 = vmul.f32 1.0, %v152
    %v154 = vrcp.pop %v151
    %v155 = vmul.f32 1.0, %v154
    %v156 = vmul.f32 %v81, %v153
    %v157 = vmul.f32 %v84, %v155
    %v158 = vmul.f32 %v156, %v138
    %v159 = vmul.f32 %v157, %v141
    %v160 = vpack.c.bf16 %v159, %v158
    %v161 = vld [vmem:[%s3] sm:$0xf]
    %v162 = vld [vmem:[%s3 + $0x4] sm:$0xf]
    %v163 = vld [vmem:[%s3 + $0x8] sm:$0xf]
    %v164 = vld [vmem:[%s3 + $0xc] sm:$0xf]
    %v165 = vld [vmem:[%s3 + $0x10] sm:$0xf]
    %v166 = vld [vmem:[%s3 + $0x14] sm:$0xf]
    %v167 = vld [vmem:[%s3 + $0x18] sm:$0xf]
    %v168 = vld [vmem:[%s3 + $0x1c] sm:$0xf]
    %v177 = vunpack.c.l.b16 %v161
    %v178 = vunpack.c.l.b16 %v162
    %v179 = vunpack.c.l.b16 %v163
    %v180 = vunpack.c.l.b16 %v164
    %v181 = vunpack.c.l.b16 %v165
    %v182 = vunpack.c.l.b16 %v166
    %v183 = vunpack.c.l.b16 %v167
    %v184 = vunpack.c.l.b16 %v168
    %v185 = vpack.c.b16 %v178, %v177
    %v186 = vpack.c.b16 %v180, %v179
    %v187 = vpack.c.b16 %v182, %v181
    %v188 = vpack.c.b16 %v184, %v183
    %vm193 = vcmask 523264
    %v195 = vsel %vm193, %v160, 0
    %197 = vmatprep.subr.bf16.mxu0 0
    %198 = vmatpush1.bf16.msra.mxu0 0
    %199 = vmatprep.subr.bf16.mxu0 0
    %200 = vmatpush1.bf16.msra.mxu0 0
    %201 = vmatprep.subr.bf16.mxu0 0
    %202 = vmatpush1.bf16.msra.mxu0 0
    %203 = vmatprep.subr.bf16.mxu0 0
    %204 = vmatpush1.bf16.msra.mxu0 0
    %205 = vmatprep.subr.bf16.mxu0 0
    %206 = vmatpush1.bf16.msra.mxu0 %v188
    %207 = vmatprep.subr.bf16.mxu0 0
    %208 = vmatpush1.bf16.msra.mxu0 %v187
    %209 = vmatprep.subr.bf16.mxu0 0
    %210 = vmatpush1.bf16.msra.mxu0 %v186
    %211 = vmatprep.subr.bf16.mxu0 0
    %212 = vmatpush1.bf16.msra.mxu0 %v185
    %213 = vmatprep.subr.bf16.mxu0 0
    %214 = vmatpush2.bf16.msra.mxu0 0
    %215 = vmatprep.subr.bf16.mxu0 0
    %216 = vmatpush2.bf16.msra.mxu0 0
    %217 = vmatprep.subr.bf16.mxu0 0
    %218 = vmatpush2.bf16.msra.mxu0 0
    %219 = vmatprep.subr.bf16.mxu0 0
    %220 = vmatpush2.bf16.msra.mxu0 0
    %221 = vmatprep.subr.bf16.mxu0 0
    %222 = vmatpush2.bf16.msra.mxu0 0
    %223 = vmatprep.subr.bf16.mxu0 0
    %224 = vmatpush2.bf16.msra.mxu0 0
    %225 = vmatprep.subr.bf16.mxu0 0
    %226 = vmatpush2.bf16.msra.mxu0 0
    %227 = vmatprep.subr.bf16.mxu0 0
    %228 = vmatpush2.bf16.msra.mxu0 0
    %229 = vmatprep.mubr.bf16.mxu0 0
    %230 = vmatmul.mubr.bf16.gmra.mxu0 %v195
    %v231 = vpop.f32.mrf.mxu0
    %v232 = vadd.f32 0.0, %v231
    %v233 = vpop.f32.mrf.mxu0
    %v234 = vpop.f32.mrf.mxu0
    %v235 = vadd.f32 0.0, %v234
    %v236 = vpop.f32.mrf.mxu0
    %237 = vdwg.mxu0
    %238 = vst.msk [vmem:[#allocation2] sm:$0xff] %vm42, %v232
    %239 = vst.msk [vmem:[#allocation2 + $0x8] sm:$0xff] %vm42, %v235
    // Predicated region
    $region18: #{tpu_custom_call.1} parent=1 // pred_check
      _
    $region19: #{tpu_custom_call.1} parent=1 // pred_check_branch
      %241 = sbr.rel (0) target = $region21
    $region20: #{tpu_custom_call.1} parent=1 // pred_region
      %s243 = ssub.s32 256, 256
      %244 = vsyncadd [#allocation3], %s243
      %s245 = sshll.u32 [#allocation2], 4
      %s246 = int_to_ptr.vmem [resolvable:$true] %s245
      %251 = dma.vmem_to_hbm [thread:$0]  %s246, 256, %s4, [#allocation3], 128, 128, 8
    $region21: #{tpu_custom_call.1} parent=1 // pred_fallthru
      _
    // Predicated region
    $region22: #{tpu_custom_call.1} parent=1 // pred_check
      _
    $region23: #{tpu_custom_call.1} parent=1 // pred_check_branch
      %253 = sbr.rel (0) target = $region25
    $region24: #{tpu_custom_call.1} parent=1 // pred_region
      %254 = dma.done [#allocation3], 256
    $region25: #{tpu_custom_call.1} parent=1 // pred_fallthru
      _
    %255 = vsyncpa [#allocation3], 1

</llo_original>
